<compile_context>
chip_gen: v7x
topology: tpu7x:2x2x1
jax: 0.10.0
libtpu: 0.0.40
codegen_flags: <defaults>
</compile_context>

<pallas_src>
import functools

import jax
import jax.numpy as jnp
from jax.experimental import pallas as pl
from jax.experimental.pallas import tpu as pltpu


def _adapter_kernel(*refs, has_residual, add_residual, apply_ln, eps):
    if has_residual:
        x_ref, res_ref, wd_ref, bd_ref, wu_ref, bu_ref, o_ref = refs
    else:
        x_ref, wd_ref, bd_ref, wu_ref, bu_ref, o_ref = refs
        res_ref = None

    # Single load of the token tile; reused for the residual add.
    x_raw = x_ref[...]
    xf = x_raw.astype(jnp.float32)
    mxu_dt = wd_ref.dtype

    # ---- LayerNorm('in'): single-pass statistics; affine folded into W_down/b_down.
    if apply_ln:
        inv_d = 1.0 / x_ref.shape[-1]
        mean = jnp.sum(xf, axis=-1, keepdims=True) * inv_d
        mean_sq = jnp.sum(xf * xf, axis=-1, keepdims=True) * inv_d
        var = jnp.maximum(mean_sq - mean * mean, 0.0)
        rstd = jax.lax.rsqrt(var + eps)
        # normalize fused with the cast to the MXU operand dtype (one f32 pass)
        xn = ((xf - mean) * rstd).astype(mxu_dt)
    else:
        xn = x_raw.astype(mxu_dt)

    # ---- down projection + ReLU (MXU, storage-dtype operands, f32 accumulation) ----
    down = jnp.dot(xn, wd_ref[...], preferred_element_type=jnp.float32)
    down = jnp.maximum(down + bd_ref[...], 0.0)
    # dropout(p=0.0) is the identity; nothing to emit.

    # ---- up projection (adapter scale pre-folded into W_up/b_up) ----
    up = jnp.dot(down.astype(wu_ref.dtype), wu_ref[...],
                 preferred_element_type=jnp.float32)
    up = up + bu_ref[...]

    if add_residual:
        res = res_ref[...].astype(jnp.float32) if has_residual else xf
        up = up + res

    o_ref[...] = up.astype(o_ref.dtype)


def _tpu_vmem_and_cores():
    """Best-effort (VMEM bytes per core, TensorCores per chip) with safe fallbacks."""
    vmem_bytes = 128 * 2 ** 20
    num_cores = 1
    try:
        info = pltpu.get_tpu_info()
        for name in ("vmem_capacity_bytes", "vmem_bytes", "vmem_size_bytes"):
            v = getattr(info, name, None)
            if v:
                vmem_bytes = int(v)
                break
        for name in ("num_tensorcores", "tensorcores_per_chip", "num_cores",
                     "cores_per_chip"):
            v = getattr(info, name, None)
            if v:
                num_cores = int(v)
                break
    except Exception:
        pass
    # v7x reports 64 MiB per TensorCore and has 2 TensorCores per chip.
    if num_cores <= 1 and vmem_bytes <= 64 * 2 ** 20:
        num_cores = 2
    return vmem_bytes, num_cores


def _pick_row_tile(M, per_row_bytes, fixed_bytes, sub, vmem_budget, num_cores,
                   requested=None):
    """Row tile: multiple of the sublane packing, sized by VMEM budget & core count.

    No divisibility-by-M requirement: the grid uses cdiv and the last (partial)
    block is padded/masked by Pallas.
    """
    if M <= sub:
        return M                                   # full-extent single block
    if requested is not None:
        tm = max(sub, min(int(requested), M))
        return max(sub, (tm // sub) * sub)
    tm_vmem = max(sub, (vmem_budget - fixed_bytes) // max(1, per_row_bytes))
    if num_cores >= 2:
        # Give each TensorCore >= 4 pipelined steps when M allows.
        tm = min(512, max(sub, M // (4 * num_cores)), tm_vmem, M)
    else:
        # Single TC (v5e/v6e): bigger tiles win; no forced grid >= 2.
        tm = min(1024, tm_vmem, M)
    return max(sub, (tm // sub) * sub)


def adapter_forward(x, w_down, b_down, w_up, b_up, gamma=None, beta=None,
                    residual=None, *, scale=1.0, eps=1e-5, add_residual=True,
                    apply_layernorm=True, tm=None, mxu_dtype=None):
    """x: [M, D] tokens (feature axis last). w_down: [D, H], w_up: [H, D].

    mxu_dtype: optionally cast the (folded) projection weights to e.g. bf16 for
    the MXU (f32 accumulation is kept); default None preserves f32 numerics.
    """
    M, D = x.shape
    H = w_down.shape[-1]
    f32 = jnp.float32

    # ---- residual plumbing: default residual is x itself (read once in-kernel);
    #      drop an unused residual stream entirely when add_residual=False.
    if residual is x or not add_residual:
        residual = None
    has_residual = residual is not None

    # ---- host-side algebra: fold LN affine into down projection, scale into up ----
    if apply_layernorm and (gamma is not None or beta is not None):
        g = jnp.ones((D,), f32) if gamma is None else gamma.reshape(D).astype(f32)
        b = jnp.zeros((D,), f32) if beta is None else beta.reshape(D).astype(f32)
        wd = (g.reshape(D, 1) * w_down.astype(f32)).astype(w_down.dtype)
        bd = b.reshape(1, D) @ w_down.astype(f32) + b_down.reshape(1, H).astype(f32)
    else:
        wd = w_down
        bd = b_down.reshape(1, H).astype(f32)
    wu = (w_up.astype(f32) * scale).astype(w_up.dtype)
    bu = b_up.reshape(1, D).astype(f32) * scale
    if mxu_dtype is not None:
        wd = wd.astype(mxu_dtype)
        wu = wu.astype(mxu_dtype)

    itm = jnp.dtype(x.dtype).itemsize
    wit = jnp.dtype(wd.dtype).itemsize
    rit = jnp.dtype(residual.dtype).itemsize if has_residual else 0
    sub = {4: 8, 2: 16, 1: 32}.get(itm, 8)

    vmem_bytes, num_cores = _tpu_vmem_and_cores()
    vmem_budget = (vmem_bytes * 3) // 4            # headroom for Mosaic internal scratch

    # tm-dependent VMEM per row: double-buffered x in + out (+res) + f32/MXU temps.
    per_row = 2 * D * itm + 2 * D * itm            # x in, out (2 buffers each)
    if has_residual:
        per_row += 2 * D * rit
    per_row += 2 * D * 4 + H * 4 + D * wit         # xf/up (f32), down (f32), xn (MXU dtype)
    fixed = 2 * 2 * D * H * wit + 2 * (H + D) * 4  # double-buffered weights + f32 biases

    tm = _pick_row_tile(M, per_row, fixed, sub, vmem_budget, num_cores, tm)
    grid = (pl.cdiv(M, tm),)   # last block padded/masked; all ops are row-independent

    row_spec = pl.BlockSpec((tm, D), lambda i: (i, 0))
    full = lambda shape: pl.BlockSpec(shape, lambda i: (0, 0))

    kernel = functools.partial(_adapter_kernel,
                               has_residual=has_residual,
                               add_residual=bool(add_residual),
                               apply_ln=bool(apply_layernorm),
                               eps=float(eps))

    in_specs = [row_spec]
    args = [x]
    if has_residual:
        in_specs.append(row_spec)
        args.append(residual)
    in_specs += [full((D, H)), full((1, H)), full((H, D)), full((1, D))]
    args += [wd, bd, wu, bu]

    # ---- advisory cost estimate for the XLA scheduler ----
    streams = 3 if has_residual else 2             # x (+res) + out
    bytes_accessed = streams * M * D * itm + 2 * D * H * wit + (H + D) * 4
    cost = pl.CostEstimate(flops=4 * M * D * H,
                           transcendentals=M if apply_layernorm else 0,
                           bytes_accessed=int(bytes_accessed))

    # ---- VMEM request: ~2x estimate + margin, ceiled at 3/4 of physical VMEM ----
    vmem_est = fixed + tm * per_row
    vmem_limit = int(min(vmem_budget, 2 * vmem_est + (8 << 20)))

    return pl.pallas_call(
        kernel,
        out_shape=jax.ShapeDtypeStruct((M, D), x.dtype),
        grid_spec=pltpu.PrefetchScalarGridSpec(
            num_scalar_prefetch=0,
            grid=grid,
            in_specs=in_specs,
            out_specs=row_spec,
        ),
        compiler_params=pltpu.CompilerParams(
            dimension_semantics=("parallel",),
            vmem_limit_bytes=vmem_limit),
        cost_estimate=cost,
    )(*args)


def adapter_ref(x, gamma, beta, w_down, b_down, w_up, b_up,
                *, scale=1.0, eps=1e-5, residual=None, add_residual=True):
    """Pure-JAX reference matching the PyTorch forward (unfolded)."""
    xf = x.astype(jnp.float32)
    res = xf if residual is None else residual.astype(jnp.float32)
    mean = jnp.mean(xf, axis=-1, keepdims=True)
    var = jnp.mean((xf - mean) ** 2, axis=-1, keepdims=True)
    xn = (xf - mean) / jnp.sqrt(var + eps) * gamma + beta
    down = jnp.maximum(xn @ w_down + b_down, 0.0)
    up = (down @ w_up + b_up) * scale
    out = up + res if add_residual else up
    return out.astype(x.dtype)


if __name__ == "__main__":
    # Small shapes consistent with the module: batch=2, seq=8, d_model=32, bottleneck=16.
    B, N, D, Hb = 2, 8, 32, 16
    key = jax.random.PRNGKey(0)
    k_x, k_x2, k_wd, k_wu, k_bd, k_bu, k_g, k_b, k_r = jax.random.split(key, 9)

    # Deterministic synthetic parameters.
    # NOTE: the module's 'lora' init would zero W_up / biases (making the adapter a
    # pass-through); we use non-trivial values so the kernel path is exercised.
    bound = 1.0 / (D ** 0.5)
    w_down = jax.random.uniform(k_wd, (D, Hb), minval=-bound, maxval=bound, dtype=jnp.float32)
    b_down = jax.random.uniform(k_bd, (Hb,), minval=-bound, maxval=bound, dtype=jnp.float32)
    w_up   = jax.random.uniform(k_wu, (Hb, D), minval=-0.1, maxval=0.1, dtype=jnp.float32)
    b_up   = jax.random.uniform(k_bu, (D,), minval=-0.1, maxval=0.1, dtype=jnp.float32)
    gamma  = 1.0 + 0.1 * jax.random.normal(k_g, (D,), dtype=jnp.float32)
    beta   = 0.1 * jax.random.normal(k_b, (D,), dtype=jnp.float32)

    # --- 1) default path: residual is x (single HBM stream), tokens [B*N, D] ---
    x = jax.random.normal(k_x, (B * N, D), dtype=jnp.float32)
    out = adapter_forward(x, w_down, b_down, w_up, b_up, gamma=gamma, beta=beta, scale=1.0)
    out = jax.block_until_ready(out)
    ref = adapter_ref(x, gamma, beta, w_down, b_down, w_up, b_up, scale=1.0)
    assert jnp.allclose(out, ref, atol=1e-4, rtol=1e-4), "mismatch (default path)"

    # --- 2) ViT-like token count (M = 2*197): exercises the cdiv / padded last block ---
    x2 = jax.random.normal(k_x2, (2 * 197, D), dtype=jnp.float32)
    out2 = jax.block_until_ready(
        adapter_forward(x2, w_down, b_down, w_up, b_up, gamma=gamma, beta=beta, scale=1.0))
    ref2 = adapter_ref(x2, gamma, beta, w_down, b_down, w_up, b_up, scale=1.0)
    assert jnp.allclose(out2, ref2, atol=1e-4, rtol=1e-4), "mismatch (padded tile path)"

    # --- 3) explicit residual tensor (separate stream) ---
    res = jax.random.normal(k_r, (B * N, D), dtype=jnp.float32)
    out3 = jax.block_until_ready(
        adapter_forward(x, w_down, b_down, w_up, b_up, gamma=gamma, beta=beta,
                        scale=1.0, residual=res))
    ref3 = adapter_ref(x, gamma, beta, w_down, b_down, w_up, b_up, scale=1.0, residual=res)
    assert jnp.allclose(out3, ref3, atol=1e-4, rtol=1e-4), "mismatch (explicit residual)"

    # Reshape back to [B, N, D] if the caller wants token layout.
    _ = out.reshape(B, N, D)

    print("KERNEL_OK")
</pallas_src>

<mosaic_0001>
module attributes {stable_mosaic.version = 11 : i64} {
  func.func @_adapter_kernel(%arg0: i32, %arg1: memref<16x32xf32, #tpu.memory_space<vmem>>, %arg2: memref<32x16xf32, #tpu.memory_space<vmem>>, %arg3: memref<1x16xf32, #tpu.memory_space<vmem>>, %arg4: memref<16x32xf32, #tpu.memory_space<vmem>>, %arg5: memref<1x32xf32, #tpu.memory_space<vmem>>, %arg6: memref<16x32xf32, #tpu.memory_space<vmem>>) attributes {dimension_semantics = [#tpu.dimension_semantics<parallel>], iteration_bounds = array<i64: 1>, scalar_prefetch = 0 : i64, scratch_operands = 0 : i64, tpu.core_type = #tpu.core_type<tc>, window_params = [{transform_indices = @transform_0, window_bounds = array<i64: 16, 32>}, {pipeline_mode = #tpu.pipeline_mode<synchronous>, transform_indices = @transform_1, window_bounds = array<i64: 32, 16>}, {pipeline_mode = #tpu.pipeline_mode<synchronous>, transform_indices = @transform_2, window_bounds = array<i64: 1, 16>}, {pipeline_mode = #tpu.pipeline_mode<synchronous>, transform_indices = @transform_3, window_bounds = array<i64: 16, 32>}, {pipeline_mode = #tpu.pipeline_mode<synchronous>, transform_indices = @transform_4, window_bounds = array<i64: 1, 32>}, {transform_indices = @transform_5, window_bounds = array<i64: 16, 32>}]} {
    %c0 = arith.constant 0 : index
    %c0_0 = arith.constant 0 : index
    %0 = vector.load %arg1[%c0, %c0_0] : memref<16x32xf32, #tpu.memory_space<vmem>>, vector<16x32xf32>
    %cst = arith.constant dense<0.000000e+00> : vector<16xf32>
    %1 = vector.multi_reduction <add>, %0, %cst [1] : vector<16x32xf32> to vector<16xf32>
    %2 = vector.shape_cast %1 : vector<16xf32> to vector<16x1xf32>
    %cst_1 = arith.constant 3.125000e-02 : f32
    %3 = vector.broadcast %cst_1 : f32 to vector<16x1xf32>
    %4 = arith.mulf %2, %3 : vector<16x1xf32>
    %5 = arith.mulf %0, %0 : vector<16x32xf32>
    %cst_2 = arith.constant dense<0.000000e+00> : vector<16xf32>
    %6 = vector.multi_reduction <add>, %5, %cst_2 [1] : vector<16x32xf32> to vector<16xf32>
    %7 = vector.shape_cast %6 : vector<16xf32> to vector<16x1xf32>
    %cst_3 = arith.constant 3.125000e-02 : f32
    %8 = vector.broadcast %cst_3 : f32 to vector<16x1xf32>
    %9 = arith.mulf %7, %8 : vector<16x1xf32>
    %10 = arith.mulf %4, %4 : vector<16x1xf32>
    %11 = arith.subf %9, %10 : vector<16x1xf32>
    %cst_4 = arith.constant 0.000000e+00 : f32
    %12 = vector.broadcast %cst_4 : f32 to vector<16x1xf32>
    %13 = arith.maximumf %11, %12 : vector<16x1xf32>
    %cst_5 = arith.constant 9.99999974E-6 : f32
    %14 = vector.broadcast %cst_5 : f32 to vector<16x1xf32>
    %15 = arith.addf %13, %14 : vector<16x1xf32>
    %16 = math.rsqrt %15 : vector<16x1xf32>
    %17 = vector.broadcast %4 : vector<16x1xf32> to vector<16x32xf32>
    %18 = arith.subf %0, %17 : vector<16x32xf32>
    %19 = vector.broadcast %16 : vector<16x1xf32> to vector<16x32xf32>
    %20 = arith.mulf %18, %19 : vector<16x32xf32>
    %c0_6 = arith.constant 0 : index
    %c0_7 = arith.constant 0 : index
    %21 = vector.load %arg2[%c0_6, %c0_7] : memref<32x16xf32, #tpu.memory_space<vmem>>, vector<32x16xf32>
    %cst_8 = arith.constant dense<0.000000e+00> : vector<16x16xf32>
    %22 = tpu.matmul %20, %21, %cst_8 {dimension_numbers = #tpu.dot_dimension_numbers<[1], [0], [0], [1], [0, 0, 1, 1], [], []>} : vector<16x32xf32>, vector<32x16xf32>, vector<16x16xf32> -> vector<16x16xf32>
    %c0_9 = arith.constant 0 : index
    %c0_10 = arith.constant 0 : index
    %23 = vector.load %arg3[%c0_9, %c0_10] : memref<1x16xf32, #tpu.memory_space<vmem>>, vector<1x16xf32>
    %24 = vector.broadcast %23 : vector<1x16xf32> to vector<16x16xf32>
    %25 = arith.addf %22, %24 : vector<16x16xf32>
    %cst_11 = arith.constant 0.000000e+00 : f32
    %26 = vector.broadcast %cst_11 : f32 to vector<16x16xf32>
    %27 = arith.maximumf %25, %26 : vector<16x16xf32>
    %c0_12 = arith.constant 0 : index
    %c0_13 = arith.constant 0 : index
    %28 = vector.load %arg4[%c0_12, %c0_13] : memref<16x32xf32, #tpu.memory_space<vmem>>, vector<16x32xf32>
    %cst_14 = arith.constant dense<0.000000e+00> : vector<16x32xf32>
    %29 = tpu.matmul %27, %28, %cst_14 {dimension_numbers = #tpu.dot_dimension_numbers<[1], [0], [0], [1], [0, 0, 1, 1], [], []>} : vector<16x16xf32>, vector<16x32xf32>, vector<16x32xf32> -> vector<16x32xf32>
    %c0_15 = arith.constant 0 : index
    %c0_16 = arith.constant 0 : index
    %30 = vector.load %arg5[%c0_15, %c0_16] : memref<1x32xf32, #tpu.memory_space<vmem>>, vector<1x32xf32>
    %31 = vector.broadcast %30 : vector<1x32xf32> to vector<16x32xf32>
    %32 = arith.addf %29, %31 : vector<16x32xf32>
    %33 = arith.addf %32, %0 : vector<16x32xf32>
    %c0_17 = arith.constant 0 : index
    %c0_18 = arith.constant 0 : index
    %34 = vector.load %arg6[%c0_17, %c0_18] : memref<16x32xf32, #tpu.memory_space<vmem>>, vector<16x32xf32>
    tpu.vector_store %arg6[%c0_17, %c0_18], %33 {strides = array<i32>} : memref<16x32xf32, #tpu.memory_space<vmem>>, vector<16x32xf32>,
    return
  }
  func.func @transform_0(%arg0: i32) -> (i32, i32) {
    %c0_i32 = arith.constant 0 : i32
    %c0_i32_0 = arith.constant 0 : i32
    return %arg0, %c0_i32 : i32, i32
  }
  func.func @transform_1(%arg0: i32) -> (i32, i32) {
    %c0_i32 = arith.constant 0 : i32
    %c0_i32_0 = arith.constant 0 : i32
    %c0_i32_1 = arith.constant 0 : i32
    return %c0_i32, %c0_i32_0 : i32, i32
  }
  func.func @transform_2(%arg0: i32) -> (i32, i32) {
    %c0_i32 = arith.constant 0 : i32
    %c0_i32_0 = arith.constant 0 : i32
    %c0_i32_1 = arith.constant 0 : i32
    return %c0_i32, %c0_i32_0 : i32, i32
  }
  func.func @transform_3(%arg0: i32) -> (i32, i32) {
    %c0_i32 = arith.constant 0 : i32
    %c0_i32_0 = arith.constant 0 : i32
    %c0_i32_1 = arith.constant 0 : i32
    return %c0_i32, %c0_i32_0 : i32, i32
  }
  func.func @transform_4(%arg0: i32) -> (i32, i32) {
    %c0_i32 = arith.constant 0 : i32
    %c0_i32_0 = arith.constant 0 : i32
    %c0_i32_1 = arith.constant 0 : i32
    return %c0_i32, %c0_i32_0 : i32, i32
  }
  func.func @transform_5(%arg0: i32) -> (i32, i32) {
    %c0_i32 = arith.constant 0 : i32
    %c0_i32_0 = arith.constant 0 : i32
    return %arg0, %c0_i32 : i32, i32
  }
}

</mosaic_0001>

<llo_original>
// kernel: tpu_custom_call.1
$region0: #{tpu_custom_call.1}
  #allocation0 [shape = 'u32[]', space=smem, size = 0x4, offset = 0x4, fixed_abs, tag = 'smem constant byte address 0x4 - core index']
  #allocation1 [shape = 'u32[144,128]{1,0:T(1,128)}', space=vmem, size = 0x12000, scoped, tag = 'internal scratch']
  %s0 = inlined_call_operand.vmem [shape: f32[16,32], index: 0, kind: input, shape index: {}]
  %s1 = inlined_call_operand.vmem [shape: f32[32,16], index: 1, kind: input, shape index: {}]
  %s2 = inlined_call_operand.vmem [shape: f32[1,16], index: 2, kind: input, shape index: {}]
  %s3 = inlined_call_operand.vmem [shape: f32[16,32], index: 3, kind: input, shape index: {}]
  %s4 = inlined_call_operand.vmem [shape: f32[1,32], index: 4, kind: input, shape index: {}]
  %s5 = inlined_call_operand.hbm [shape: f32[16,32], index: 5, kind: output, shape index: {}]
  %s6 = sld [smem:[#allocation0]]
  $region30: #{tpu_custom_call.1} parent=0
    _
  %s8 = ssub.s32 1, %s6
  %s9 = scalar_select 0, %s8, %s6
  $region1: #{tpu_custom_call.1} parent=0
    #allocation2 [shape = 'u8[8192]{0}', space=vmem, size = 0x2000, scoped, tag = 'output window, operand 0, single buffered']
    #allocation3 [shape = 's32[1]{0}', space=sflag, size = 0x4, scoped, tag = 'scoped memory for tpu_custom_call.1']
    %10 = vsyncpa [#allocation3], 0
    // Predicated region
    $region2: #{tpu_custom_call.1} parent=1 // pred_check
      _
    $region3: #{tpu_custom_call.1} parent=1 // pred_check_branch
      %12 = sbr.rel (0) target = $region5
    $region4: #{tpu_custom_call.1} parent=1 // pred_region
      _
    $region5: #{tpu_custom_call.1} parent=1 // pred_fallthru
      _
    // Predicated region
    $region6: #{tpu_custom_call.1} parent=1 // pred_check
      _
    $region7: #{tpu_custom_call.1} parent=1 // pred_check_branch
      %14 = sbr.rel (0) target = $region9
    $region8: #{tpu_custom_call.1} parent=1 // pred_region
      _
    $region9: #{tpu_custom_call.1} parent=1 // pred_fallthru
      _
    // Predicated region
    $region10: #{tpu_custom_call.1} parent=1 // pred_check
      _
    $region11: #{tpu_custom_call.1} parent=1 // pred_check_branch
      %16 = sbr.rel (0) target = $region13
    $region12: #{tpu_custom_call.1} parent=1 // pred_region
      _
    $region13: #{tpu_custom_call.1} parent=1 // pred_fallthru
      _
    // Predicated region
    $region14: #{tpu_custom_call.1} parent=1 // pred_check
      _
    $region15: #{tpu_custom_call.1} parent=1 // pred_check_branch
      %18 = sbr.rel (0) target = $region17
    $region16: #{tpu_custom_call.1} parent=1 // pred_region
      _
    $region17: #{tpu_custom_call.1} parent=1 // pred_fallthru
      _
    // Predicated region
    $region18: #{tpu_custom_call.1} parent=1 // pred_check
      _
    $region19: #{tpu_custom_call.1} parent=1 // pred_check_branch
      %20 = sbr.rel (0) target = $region21
    $region20: #{tpu_custom_call.1} parent=1 // pred_region
      _
    $region21: #{tpu_custom_call.1} parent=1 // pred_fallthru
      _
    %v21 = vld [vmem:[%s0] sm:$0xff]
    %v22 = vld [vmem:[%s0 + $0x8] sm:$0xff]
    %vm23 = vcmask 261120
    %v24 = vsel %vm23, %v21, 0.0
    %25 = vadd.xlane.f32.xlu0 %v24
    %v26 = vpop.xlane.xlu0 %25
    %v27 = vsel %vm23, %v22, 0.0
    %28 = vadd.xlane.f32.xlu0 %v27
    %v29 = vpop.xlane.xlu0 %28
    %v30 = vmul.f32 %v26, 0.03125
    %v31 = vmul.f32 %v29, 0.03125
    %v32 = vmul.f32 %v21, %v21
    %v33 = vmul.f32 %v22, %v22
    %v34 = vsel %vm23, %v32, 0.0
    %35 = vadd.xlane.f32.xlu0 %v34
    %v36 = vpop.xlane.xlu0 %35
    %v37 = vsel %vm23, %v33, 0.0
    %38 = vadd.xlane.f32.xlu0 %v37
    %v39 = vpop.xlane.xlu0 %38
    %v40 = vmul.f32 %v36, 0.03125
    %v41 = vmul.f32 %v39, 0.03125
    %v42 = vmul.f32 %v30, %v30
    %v43 = vmul.f32 %v31, %v31
    %v44 = vsub.f32 %v40, %v42
    %v45 = vsub.f32 %v41, %v43
    %v46 = vmax.f32 %v44, 0.0
    %v47 = vmax.f32 %v45, 0.0
    %v48 = vadd.f32 %v46, 1e-05
    %v49 = vadd.f32 %v47, 1e-05
    %v50 = vrsqrt.pop %v48
    %v51 = vrsqrt.pop %v49
    %v52 = vsub.f32 %v21, %v30
    %v53 = vsub.f32 %v22, %v31
    %v54 = vmul.f32 %v52, %v50
    %v55 = vmul.f32 %v53, %v51
    %v56 = vld [vmem:[%s1] sm:$0xff]
    %v57 = vld [vmem:[%s1 + $0x8] sm:$0xff]
    %v58 = vld [vmem:[%s1 + $0x10] sm:$0xff]
    %v59 = vld [vmem:[%s1 + $0x18] sm:$0xff]
    %v60 = vld [vmem:[%s2] sm:$0x1]
    %v62 = vlaneseq
    %v63 = vshrl.u32 %v62, 7
    %v64 = vsub.s32 0, %v63
    %v65 = vrot.slane %v60, %v64
    %v68 = vsel %vm23, %v54, 0
    %v71 = vsel %vm23, %v55, 0
    %73 = vmatprep.subr.mxu0 0.0
    %74 = vmatpush1.msra.mxu0 %v56
    %75 = vmatprep.subr.mxu0 0.0
    %76 = vmatpush1.msra.mxu0 %v57
    %77 = vmatprep.subr.mxu0 0.0
    %78 = vmatpush1.msra.mxu0 %v58
    %79 = vmatprep.subr.mxu0 0.0
    %80 = vmatpush1.msra.mxu0 %v59
    %81 = vmatprep.subr.mxu0 0.0
    %82 = vmatpush1.msra.mxu0 0.0
    %83 = vmatprep.subr.mxu0 0.0
    %84 = vmatpush1.msra.mxu0 0.0
    %85 = vmatprep.subr.mxu0 0.0
    %86 = vmatpush1.msra.mxu0 0.0
    %87 = vmatprep.subr.mxu0 0.0
    %88 = vmatpush1.msra.mxu0 0.0
    %89 = vmatprep.subr.mxu0 0.0
    %90 = vmatpush1.msra.mxu0 0.0
    %91 = vmatprep.subr.mxu0 0.0
    %92 = vmatpush1.msra.mxu0 0.0
    %93 = vmatprep.subr.mxu0 0.0
    %94 = vmatpush1.msra.mxu0 0.0
    %95 = vmatprep.subr.mxu0 0.0
    %96 = vmatpush1.msra.mxu0 0.0
    %97 = vmatprep.subr.mxu0 0.0
    %98 = vmatpush1.msra.mxu0 0.0
    %99 = vmatprep.subr.mxu0 0.0
    %100 = vmatpush1.msra.mxu0 0.0
    %101 = vmatprep.subr.mxu0 0.0
    %102 = vmatpush1.msra.mxu0 0.0
    %103 = vmatprep.subr.mxu0 0.0
    %104 = vmatpush1.msra.mxu0 0.0
    %105 = vmatprep.subr.mxu0 0.0
    %106 = vmatpush1.msra.mxu0 0.0
    %107 = vmatprep.subr.mxu0 0.0
    %108 = vmatpush1.msra.mxu0 0.0
    %109 = vmatprep.subr.mxu0 0.0
    %110 = vmatpush1.msra.mxu0 0.0
    %111 = vmatprep.subr.mxu0 0.0
    %112 = vmatpush1.msra.mxu0 0.0
    %113 = vmatprep.subr.mxu0 0.0
    %114 = vmatpush1.msra.mxu0 0.0
    %115 = vmatprep.subr.mxu0 0.0
    %116 = vmatpush1.msra.mxu0 0.0
    %117 = vmatprep.subr.mxu0 0.0
    %118 = vmatpush1.msra.mxu0 0.0
    %119 = vmatprep.subr.mxu0 0.0
    %120 = vmatpush1.msra.mxu0 0.0
    %121 = vmatprep.subr.mxu0 0.0
    %122 = vmatpush1.msra.mxu0 0.0
    %123 = vmatprep.subr.mxu0 0.0
    %124 = vmatpush1.msra.mxu0 0.0
    %125 = vmatprep.subr.mxu0 0.0
    %126 = vmatpush1.msra.mxu0 0.0
    %127 = vmatprep.subr.mxu0 0.0
    %128 = vmatpush1.msra.mxu0 0.0
    %129 = vmatprep.subr.mxu0 0.0
    %130 = vmatpush1.msra.mxu0 0.0
    %131 = vmatprep.subr.mxu0 0.0
    %132 = vmatpush1.msra.mxu0 0.0
    %133 = vmatprep.subr.mxu0 0.0
    %134 = vmatpush1.msra.mxu0 0.0
    %135 = vmatprep.subr.mxu0 0.0
    %136 = vmatpush1.msra.mxu0 0.0
    %137 = vmatprep.mubr.f32.mxu0 0.0
    %138 = vmatmul.mubr.f32.gmra.mrb[0].mxu0 %v68
    %v139 = vpop.f32.mrb[0].mxu0
    %v140 = vadd.f32 %v65, %v139
    %v141 = vpop.f32.mrb[0].mxu0
    %142 = vmatprep.mubr.f32.mxu0 0.0
    %143 = vmatmul.mubr.f32.gmra.mrb[0].mxu0 %v71
    %v144 = vpop.f32.mrb[0].mxu0
    %v145 = vadd.f32 %v65, %v144
    %v146 = vpop.f32.mrb[0].mxu0
    %147 = vdwg.mxu0
    %v148 = vmax.f32 %v140, 0.0
    %v149 = vmax.f32 %v145, 0.0
    %v150 = vld [vmem:[%s3] sm:$0xff]
    %v151 = vld [vmem:[%s3 + $0x8] sm:$0xff]
    %v152 = vld [vmem:[%s4] sm:$0x1]
    %v154 = vlaneseq
    %v155 = vshrl.u32 %v154, 7
    %v156 = vsub.s32 0, %v155
    %v157 = vrot.slane %v152, %v156
    %vm159 = vcmask 130048
    %v161 = vsel %vm159, %v148, 0
    %v164 = vsel %vm159, %v149, 0
    %166 = vmatprep.subr.mxu0 0.0
    %167 = vmatpush1.msra.mxu0 %v150
    %168 = vmatprep.subr.mxu0 0.0
    %169 = vmatpush1.msra.mxu0 %v151
    %170 = vmatprep.subr.mxu0 0.0
    %171 = vmatpush1.msra.mxu0 0.0
    %172 = vmatprep.subr.mxu0 0.0
    %173 = vmatpush1.msra.mxu0 0.0
    %174 = vmatprep.subr.mxu0 0.0
    %175 = vmatpush1.msra.mxu0 0.0
    %176 = vmatprep.subr.mxu0 0.0
    %177 = vmatpush1.msra.mxu0 0.0
    %178 = vmatprep.subr.mxu0 0.0
    %179 = vmatpush1.msra.mxu0 0.0
    %180 = vmatprep.subr.mxu0 0.0
    %181 = vmatpush1.msra.mxu0 0.0
    %182 = vmatprep.subr.mxu0 0.0
    %183 = vmatpush1.msra.mxu0 0.0
    %184 = vmatprep.subr.mxu0 0.0
    %185 = vmatpush1.msra.mxu0 0.0
    %186 = vmatprep.subr.mxu0 0.0
    %187 = vmatpush1.msra.mxu0 0.0
    %188 = vmatprep.subr.mxu0 0.0
    %189 = vmatpush1.msra.mxu0 0.0
    %190 = vmatprep.subr.mxu0 0.0
    %191 = vmatpush1.msra.mxu0 0.0
    %192 = vmatprep.subr.mxu0 0.0
    %193 = vmatpush1.msra.mxu0 0.0
    %194 = vmatprep.subr.mxu0 0.0
    %195 = vmatpush1.msra.mxu0 0.0
    %196 = vmatprep.subr.mxu0 0.0
    %197 = vmatpush1.msra.mxu0 0.0
    %198 = vmatprep.subr.mxu0 0.0
    %199 = vmatpush1.msra.mxu0 0.0
    %200 = vmatprep.subr.mxu0 0.0
    %201 = vmatpush1.msra.mxu0 0.0
    %202 = vmatprep.subr.mxu0 0.0
    %203 = vmatpush1.msra.mxu0 0.0
    %204 = vmatprep.subr.mxu0 0.0
    %205 = vmatpush1.msra.mxu0 0.0
    %206 = vmatprep.subr.mxu0 0.0
    %207 = vmatpush1.msra.mxu0 0.0
    %208 = vmatprep.subr.mxu0 0.0
    %209 = vmatpush1.msra.mxu0 0.0
    %210 = vmatprep.subr.mxu0 0.0
    %211 = vmatpush1.msra.mxu0 0.0
    %212 = vmatprep.subr.mxu0 0.0
    %213 = vmatpush1.msra.mxu0 0.0
    %214 = vmatprep.subr.mxu0 0.0
    %215 = vmatpush1.msra.mxu0 0.0
    %216 = vmatprep.subr.mxu0 0.0
    %217 = vmatpush1.msra.mxu0 0.0
    %218 = vmatprep.subr.mxu0 0.0
    %219 = vmatpush1.msra.mxu0 0.0
    %220 = vmatprep.subr.mxu0 0.0
    %221 = vmatpush1.msra.mxu0 0.0
    %222 = vmatprep.subr.mxu0 0.0
    %223 = vmatpush1.msra.mxu0 0.0
    %224 = vmatprep.subr.mxu0 0.0
    %225 = vmatpush1.msra.mxu0 0.0
    %226 = vmatprep.subr.mxu0 0.0
    %227 = vmatpush1.msra.mxu0 0.0
    %228 = vmatprep.subr.mxu0 0.0
    %229 = vmatpush1.msra.mxu0 0.0
    %230 = vmatprep.mubr.f32.mxu0 0.0
    %231 = vmatmul.mubr.f32.gmra.mrb[0].mxu0 %v161
    %v232 = vpop.f32.mrb[0].mxu0
    %v233 = vadd.f32 %v157, %v232
    %v234 = vpop.f32.mrb[0].mxu0
    %235 = vmatprep.mubr.f32.mxu0 0.0
    %236 = vmatmul.mubr.f32.gmra.mrb[0].mxu0 %v164
    %v237 = vpop.f32.mrb[0].mxu0
    %v238 = vadd.f32 %v157, %v237
    %v239 = vpop.f32.mrb[0].mxu0
    %240 = vdwg.mxu0
    %v241 = vadd.f32 %v233, %v21
    %v242 = vadd.f32 %v238, %v22
    %243 = vst.msk [vmem:[#allocation2] sm:$0xff] %vm23, %v241
    %244 = vst.msk [vmem:[#allocation2 + $0x8] sm:$0xff] %vm23, %v242
    // Predicated region
    $region22: #{tpu_custom_call.1} parent=1 // pred_check
      _
    $region23: #{tpu_custom_call.1} parent=1 // pred_check_branch
      %246 = sbr.rel (0) target = $region25
    $region24: #{tpu_custom_call.1} parent=1 // pred_region
      %s248 = ssub.s32 256, 256
      %249 = vsyncadd [#allocation3], %s248
      %s250 = sshll.u32 [#allocation2], 4
      %s251 = int_to_ptr.vmem [resolvable:$true] %s250
      %256 = dma.vmem_to_hbm [thread:$0]  %s251, 256, %s5, [#allocation3], 128, 128, 8
    $region25: #{tpu_custom_call.1} parent=1 // pred_fallthru
      _
    // Predicated region
    $region26: #{tpu_custom_call.1} parent=1 // pred_check
      _
    $region27: #{tpu_custom_call.1} parent=1 // pred_check_branch
      %258 = sbr.rel (0) target = $region29
    $region28: #{tpu_custom_call.1} parent=1 // pred_region
      %259 = dma.done [#allocation3], 256
    $region29: #{tpu_custom_call.1} parent=1 // pred_fallthru
      _
    %260 = vsyncpa [#allocation3], 1

</llo_original>
